<compile_context>
chip_gen: v6e
topology: v6e:2x2x1
jax: 0.10.0
libtpu: 0.0.40
codegen_flags: <defaults>
</compile_context>

<pallas_src>
import jax
import jax.numpy as jnp
from jax.experimental import pallas as pl
from jax.experimental.pallas import tpu as pltpu


_MAX_TILE_B = 512                 # 512-row tiles already reach ~85% of HBM roofline
_X_TILE_BUDGET = 8 * 1024 * 1024  # budget for the double-buffered bf16 x block (bytes)


def _round_up(n, m):
    return m * ((n + m - 1) // m)


def _choose_tile_b(b, d):
    """Batch rows per grid step: VMEM-aware, lane-aligned, >= 2 steps when useful."""
    # Keep 2 (double-buffer) * tile_b * d * 2 B (bf16) under the budget (v7x: 64 MiB
    # physical / 32 MiB scoped default VMEM).
    vmem_rows = (_X_TILE_BUDGET // (2 * 2 * max(d, 1))) // 128 * 128
    cap = max(128, min(_MAX_TILE_B, vmem_rows))
    if b <= 128:
        return _round_up(b, 8)                    # single tiny grid step
    # >= 2 lane-aligned (multiple-of-128) grid steps: v7x megacore sharding across
    # both TensorCores + DMA/compute overlap; keeps output block offsets 128-aligned.
    return min(cap, _round_up(-(-b // 2), 128))


def prepare_discriminator_params(w_ih, w_hh, b_ih, b_hh, w_lin, b_lin):
    """One-time parameter repack (call at load time, NOT per forward).

    PyTorch layouts: w_ih (4H, D), w_hh (4H, H), b_ih/b_hh (4H,), w_lin (1, H),
    b_lin (1,).  w_hh is unused: h0 == 0 for a length-1 sequence.
    """
    four_h, _d = w_ih.shape
    h = four_h // 4
    hs = _round_up(h, 8)           # hidden dim lives on sublanes -> pad to 8, not 128

    w_ih = jnp.asarray(w_ih, jnp.float32)
    b_gate = jnp.asarray(b_ih, jnp.float32) + jnp.asarray(b_hh, jnp.float32)
    del w_hh  # exact: no recurrent term for a single step from zero state

    # PyTorch gate order (i, f, g, o); drop f, keep (i, g, o), pad each to Hs rows.
    w_i, _w_f, w_g, w_o = jnp.split(w_ih, 4, axis=0)      # each (H, D)
    b_i, _b_f, b_g, b_o = jnp.split(b_gate, 4)            # each (H,)

    def pad_w(m):                                          # (H, D) -> (Hs, D)
        return jnp.pad(m, ((0, hs - h), (0, 0)))

    def pad_b(v):                                          # (H,) -> (Hs,)
        return jnp.pad(v, (0, hs - h))

    w_pack = jnp.concatenate([pad_w(w_i), pad_w(w_g), pad_w(w_o)], axis=0)      # (3Hs, D)
    b_pack = jnp.concatenate([pad_b(b_i), pad_b(b_g), pad_b(b_o)]).reshape(3 * hs, 1)
    w_lin_col = jnp.pad(jnp.asarray(w_lin, jnp.float32).reshape(h, 1),
                        ((0, hs - h), (0, 0)))                                   # (Hs, 1)
    b_lin_s = jnp.asarray(b_lin, jnp.float32).reshape(1)                         # (1,)

    return {
        "w_pack": w_pack.astype(jnp.bfloat16),   # bf16 MXU operand
        "b_pack": b_pack,                        # f32 (3Hs, 1), folded LSTM biases
        "w_lin_col": w_lin_col,                  # f32 (Hs, 1), zero-padded
        "b_lin": b_lin_s,                        # f32 scalar (SMEM)
    }


def _discriminator_kernel(x_ref, w_ref, b_ref, wlin_ref, blin_ref, o_ref):
    hs = wlin_ref.shape[0]

    # gatesT = W_pack (3Hs, D) @ x^T (D, TB): contract on D; hidden on sublanes,
    # batch on lanes.  bf16 operands, f32 accumulation on the MXU; bias add fused
    # onto the matmul result.
    gates = jax.lax.dot_general(
        w_ref[...], x_ref[...],
        dimension_numbers=(((1,), (1,)), ((), ())),
        preferred_element_type=jnp.float32) + b_ref[...]          # (3Hs, TB) f32

    # Sublane-aligned gate slices (Hs % 8 == 0): no relayout.
    i_g = gates[0 * hs:1 * hs, :]
    g_g = gates[1 * hs:2 * hs, :]
    o_g = gates[2 * hs:3 * hs, :]

    # Minimal chain, all f32: c = sig(i)*tanh(g) (f*c0 == 0), h = sig(o)*tanh(c).
    c = jax.nn.sigmoid(i_g) * jnp.tanh(g_g)
    h = jax.nn.sigmoid(o_g) * jnp.tanh(c)          # (Hs, TB); padded sublanes are 0

    # N=1 head: per-lane multiply + cross-sublane (XLU) reduce -> lane-dense row.
    logit = jnp.sum(h * wlin_ref[...], axis=0, keepdims=True) + blin_ref[0]
    o_ref[...] = jax.nn.sigmoid(logit)             # (1, TB), unmasked lane-dense store


def discriminator_forward(x, params):
    """x: (B, input_dim).  params: output of prepare_discriminator_params.
    Returns sigmoid(linear(lstm_step(x))) with shape (B, 1), f32."""
    x = jnp.asarray(x)
    b, d = x.shape
    hs = params["w_lin_col"].shape[0]

    # HBM-bound at large D: stream x in bf16 (the MXU rounds to bf16 anyway).
    # Callers that already hold bf16 activations skip this convert entirely.
    if x.dtype != jnp.bfloat16:
        x = x.astype(jnp.bfloat16)

    tile_b = _choose_tile_b(b, d)
    num_tiles = pl.cdiv(b, tile_b)
    bp = num_tiles * tile_b
    if bp != b:
        # Explicit zero padding: no OOB rows ever reach the nonlinearities.
        x = jnp.pad(x, ((0, bp - b), (0, 0)))

    # Explicit VMEM budget (review: v7x has 64 MiB physical / 32 MiB scoped default).
    est = (2 * tile_b * d * 2                          # double-buffered bf16 x blocks
           + 2 * (3 * hs * d * 2 + 3 * hs * 4 + hs * 4)  # weight/bias pipeline copies
           + 2 * tile_b * 4 * 2                        # double-buffered (1, tile_b) out
           + 8 * hs * tile_b * 4)                      # f32 gates/c/h intermediates
    vmem_limit = int(min(64 * 1024 * 1024, max(16 * 1024 * 1024, 2 * est)))

    out = pl.pallas_call(
        _discriminator_kernel,
        out_shape=jax.ShapeDtypeStruct((1, bp), jnp.float32),
        grid=(num_tiles,),
        in_specs=[
            pl.BlockSpec((tile_b, d), lambda i: (i, 0)),          # x: pipelined over batch
            pl.BlockSpec((3 * hs, d), lambda i: (0, 0)),          # packed gate weights (resident)
            pl.BlockSpec((3 * hs, 1), lambda i: (0, 0)),          # folded gate bias (resident)
            pl.BlockSpec((hs, 1), lambda i: (0, 0)),              # linear weight column (resident)
            pl.BlockSpec(memory_space=pltpu.MemorySpace.SMEM),    # b_lin scalar
        ],
        out_specs=pl.BlockSpec((1, tile_b), lambda i: (0, i)),    # lane-dense output row
        compiler_params=pltpu.CompilerParams(
            dimension_semantics=("parallel",),
            vmem_limit_bytes=vmem_limit),
    )(x, params["w_pack"], params["b_pack"], params["w_lin_col"], params["b_lin"])

    return out[0, :b].reshape(b, 1)


def _reference_forward(x, w_ih, w_hh, b_ih, b_hh, w_lin, b_lin,
                       matmul_dtype=jnp.float32):
    """Pure-JAX reference of the same math (optionally with bf16-rounded GEMM inputs)."""
    xm = x.astype(matmul_dtype).astype(jnp.float32)
    wm = w_ih.astype(matmul_dtype).astype(jnp.float32)
    gates = xm @ wm.T + b_ih + b_hh
    h_dim = w_hh.shape[1]
    i = jax.nn.sigmoid(gates[:, 0 * h_dim:1 * h_dim])
    g = jnp.tanh(gates[:, 2 * h_dim:3 * h_dim])
    o = jax.nn.sigmoid(gates[:, 3 * h_dim:4 * h_dim])
    h = o * jnp.tanh(i * g)
    return jax.nn.sigmoid(h @ w_lin.T + b_lin)


if __name__ == "__main__":
    B, D, H = 8, 16, 50   # batch, input_dim, hidden_dim (module default hidden_dim=50)

    key = jax.random.PRNGKey(0)
    kx, k1, k2, k3, k4, k5, k6 = jax.random.split(key, 7)

    scale = 1.0 / jnp.sqrt(jnp.float32(H))   # matches PyTorch LSTM/Linear uniform init range
    x = jax.random.normal(kx, (B, D), jnp.float32)
    w_ih = jax.random.uniform(k1, (4 * H, D), jnp.float32, -scale, scale)
    w_hh = jax.random.uniform(k2, (4 * H, H), jnp.float32, -scale, scale)
    b_ih = jax.random.uniform(k3, (4 * H,), jnp.float32, -scale, scale)
    b_hh = jax.random.uniform(k4, (4 * H,), jnp.float32, -scale, scale)
    w_lin = jax.random.uniform(k5, (1, H), jnp.float32, -scale, scale)
    b_lin = jax.random.uniform(k6, (1,), jnp.float32, -scale, scale)

    # One-time parameter repack (load time), then the hot forward path.
    params = jax.tree_util.tree_map(jax.block_until_ready,
                                    prepare_discriminator_params(
                                        w_ih, w_hh, b_ih, b_hh, w_lin, b_lin))
    forward = jax.jit(discriminator_forward)

    out = jax.block_until_ready(forward(x, params))
    assert out.shape == (B, 1)

    # Tight check against a reference using the same bf16-rounded GEMM inputs.
    ref_bf16 = _reference_forward(x, w_ih, w_hh, b_ih, b_hh, w_lin, b_lin,
                                  matmul_dtype=jnp.bfloat16)
    assert jnp.allclose(out, ref_bf16, atol=1e-3, rtol=1e-3)

    # Loose check against the pure-f32 PyTorch-equivalent math (bf16 MXU rounding).
    ref_f32 = _reference_forward(x, w_ih, w_hh, b_ih, b_hh, w_lin, b_lin)
    assert jnp.allclose(out, ref_f32, atol=2e-2, rtol=2e-2)

    print("KERNEL_OK")
</pallas_src>

<mosaic_0001>
module attributes {stable_mosaic.version = 11 : i64} {
  func.func @_discriminator_kernel(%arg0: i32, %arg1: memref<8x16xbf16, #tpu.memory_space<vmem>>, %arg2: memref<168x16xbf16, #tpu.memory_space<vmem>>, %arg3: memref<168x1xf32, #tpu.memory_space<vmem>>, %arg4: memref<56x1xf32, #tpu.memory_space<vmem>>, %arg5: memref<1xf32, #tpu.memory_space<smem>>, %arg6: memref<1x8xf32, #tpu.memory_space<vmem>>) attributes {dimension_semantics = [#tpu.dimension_semantics<parallel>], iteration_bounds = array<i64: 1>, scalar_prefetch = 0 : i64, scratch_operands = 0 : i64, tpu.core_type = #tpu.core_type<tc>, window_params = [{transform_indices = @transform_0, window_bounds = array<i64: 8, 16>}, {pipeline_mode = #tpu.pipeline_mode<synchronous>, transform_indices = @transform_1, window_bounds = array<i64: 168, 16>}, {pipeline_mode = #tpu.pipeline_mode<synchronous>, transform_indices = @transform_2, window_bounds = array<i64: 168, 1>}, {pipeline_mode = #tpu.pipeline_mode<synchronous>, transform_indices = @transform_3, window_bounds = array<i64: 56, 1>}, {transform_indices = @transform_4, window_bounds = array<i64: 1>}, {transform_indices = @transform_5, window_bounds = array<i64: 1, 8>}]} {
    %c0 = arith.constant 0 : index
    %c0_0 = arith.constant 0 : index
    %0 = vector.load %arg2[%c0, %c0_0] : memref<168x16xbf16, #tpu.memory_space<vmem>>, vector<168x16xbf16>
    %c0_1 = arith.constant 0 : index
    %c0_2 = arith.constant 0 : index
    %1 = vector.load %arg1[%c0_1, %c0_2] : memref<8x16xbf16, #tpu.memory_space<vmem>>, vector<8x16xbf16>
    %cst = arith.constant dense<0.000000e+00> : vector<168x8xf32>
    %2 = tpu.matmul %0, %1, %cst {dimension_numbers = #tpu.dot_dimension_numbers<[1], [1], [0], [0], [0, 0, 1, 0], [], []>} : vector<168x16xbf16>, vector<8x16xbf16>, vector<168x8xf32> -> vector<168x8xf32>
    %c0_3 = arith.constant 0 : index
    %c0_4 = arith.constant 0 : index
    %3 = vector.load %arg3[%c0_3, %c0_4] : memref<168x1xf32, #tpu.memory_space<vmem>>, vector<168x1xf32>
    %4 = vector.broadcast %3 : vector<168x1xf32> to vector<168x8xf32>
    %5 = arith.addf %2, %4 : vector<168x8xf32>
    %6 = vector.extract_strided_slice %5 {offsets = [0, 0], sizes = [56, 8], strides = [1, 1]} : vector<168x8xf32> to vector<56x8xf32>
    %7 = vector.extract_strided_slice %5 {offsets = [56, 0], sizes = [56, 8], strides = [1, 1]} : vector<168x8xf32> to vector<56x8xf32>
    %8 = vector.extract_strided_slice %5 {offsets = [112, 0], sizes = [56, 8], strides = [1, 1]} : vector<168x8xf32> to vector<56x8xf32>
    %9 = arith.negf %6 : vector<56x8xf32>
    %10 = math.exp %9 : vector<56x8xf32>
    %cst_5 = arith.constant 1.000000e+00 : f32
    %11 = vector.broadcast %cst_5 : f32 to vector<56x8xf32>
    %12 = arith.addf %11, %10 : vector<56x8xf32>
    %13 = arith.divf %11, %12 : vector<56x8xf32>
    %14 = math.tanh %7 : vector<56x8xf32>
    %15 = arith.mulf %13, %14 : vector<56x8xf32>
    %16 = arith.negf %8 : vector<56x8xf32>
    %17 = math.exp %16 : vector<56x8xf32>
    %cst_6 = arith.constant 1.000000e+00 : f32
    %18 = vector.broadcast %cst_6 : f32 to vector<56x8xf32>
    %19 = arith.addf %18, %17 : vector<56x8xf32>
    %20 = arith.divf %18, %19 : vector<56x8xf32>
    %21 = math.tanh %15 : vector<56x8xf32>
    %22 = arith.mulf %20, %21 : vector<56x8xf32>
    %c0_7 = arith.constant 0 : index
    %c0_8 = arith.constant 0 : index
    %23 = vector.load %arg4[%c0_7, %c0_8] : memref<56x1xf32, #tpu.memory_space<vmem>>, vector<56x1xf32>
    %24 = vector.broadcast %23 : vector<56x1xf32> to vector<56x8xf32>
    %25 = arith.mulf %22, %24 : vector<56x8xf32>
    %cst_9 = arith.constant dense<0.000000e+00> : vector<8xf32>
    %26 = vector.multi_reduction <add>, %25, %cst_9 [0] : vector<56x8xf32> to vector<8xf32>
    %27 = vector.shape_cast %26 : vector<8xf32> to vector<1x8xf32>
    %c0_10 = arith.constant 0 : index
    %28 = memref.load %arg5[%c0_10] : memref<1xf32, #tpu.memory_space<smem>>
    %29 = vector.broadcast %28 : f32 to vector<1x8xf32>
    %30 = arith.addf %27, %29 : vector<1x8xf32>
    %31 = arith.negf %30 : vector<1x8xf32>
    %32 = math.exp %31 : vector<1x8xf32>
    %cst_11 = arith.constant 1.000000e+00 : f32
    %33 = vector.broadcast %cst_11 : f32 to vector<1x8xf32>
    %34 = arith.addf %33, %32 : vector<1x8xf32>
    %35 = arith.divf %33, %34 : vector<1x8xf32>
    %c0_12 = arith.constant 0 : index
    %c0_13 = arith.constant 0 : index
    %36 = vector.load %arg6[%c0_12, %c0_13] : memref<1x8xf32, #tpu.memory_space<vmem>>, vector<1x8xf32>
    tpu.vector_store %arg6[%c0_12, %c0_13], %35 {strides = array<i32>} : memref<1x8xf32, #tpu.memory_space<vmem>>, vector<1x8xf32>,
    return
  }
  func.func @transform_0(%arg0: i32) -> (i32, i32) {
    %c0_i32 = arith.constant 0 : i32
    %c0_i32_0 = arith.constant 0 : i32
    return %arg0, %c0_i32 : i32, i32
  }
  func.func @transform_1(%arg0: i32) -> (i32, i32) {
    %c0_i32 = arith.constant 0 : i32
    %c0_i32_0 = arith.constant 0 : i32
    %c0_i32_1 = arith.constant 0 : i32
    return %c0_i32, %c0_i32_0 : i32, i32
  }
  func.func @transform_2(%arg0: i32) -> (i32, i32) {
    %c0_i32 = arith.constant 0 : i32
    %c0_i32_0 = arith.constant 0 : i32
    %c0_i32_1 = arith.constant 0 : i32
    return %c0_i32, %c0_i32_0 : i32, i32
  }
  func.func @transform_3(%arg0: i32) -> (i32, i32) {
    %c0_i32 = arith.constant 0 : i32
    %c0_i32_0 = arith.constant 0 : i32
    %c0_i32_1 = arith.constant 0 : i32
    return %c0_i32, %c0_i32_0 : i32, i32
  }
  func.func @transform_4(%arg0: i32) -> i32 {
    %c0_i32 = arith.constant 0 : i32
    %c0_i32_0 = arith.constant 0 : i32
    return %c0_i32 : i32
  }
  func.func @transform_5(%arg0: i32) -> (i32, i32) {
    %c0_i32 = arith.constant 0 : i32
    %c0_i32_0 = arith.constant 0 : i32
    return %c0_i32, %arg0 : i32, i32
  }
}

</mosaic_0001>

<llo_original>
// kernel: discriminator_forward.1
$region0: #{discriminator_forward.1}
  #allocation0 [shape = 'u32[]', space=smem, size = 0x4, offset = 0x4, fixed_abs, tag = 'smem constant byte address 0x4 - core index']
  #allocation1 [shape = 'u32[144,128]{1,0:T(1,128)}', space=vmem, size = 0x12000, scoped, tag = 'internal scratch']
  #allocation2 [shape = 'f32[1]{0:T(128)S(6)}', space=smem, size = 0x200, scoped, tag = 'scoped memory for discriminator_forward.1']
  %s0 = inlined_call_operand.vmem [shape: bf16[8,16], index: 0, kind: input, shape index: {}]
  %s1 = inlined_call_operand.vmem [shape: bf16[168,16], index: 1, kind: input, shape index: {}]
  %s2 = inlined_call_operand.vmem [shape: f32[168,1], index: 2, kind: input, shape index: {}]
  %s3 = inlined_call_operand.vmem [shape: f32[56,1], index: 3, kind: input, shape index: {}]
  %s4 = inlined_call_operand.<no memory space> [shape: f32[1], index: 4, kind: input, shape index: {}]
  %s5 = inlined_call_operand.hbm [shape: f32[1,8], index: 5, kind: output, shape index: {}]
  %s6 = sld [smem:[#allocation0]]
  $region30: #{discriminator_forward.1} parent=0
    _
  %s8 = ssub.s32 1, %s6
  %s9 = scalar_select 0, %s8, %s6
  %10 = sst [smem:[#allocation2]] %s4
  $region1: #{discriminator_forward.1} parent=0
    #allocation3 [shape = 'u8[512]{0}', space=vmem, size = 0x400, scoped, tag = 'output window, operand 0, single buffered']
    #allocation4 [shape = 's32[1]{0}', space=sflag, size = 0x4, scoped, tag = 'scoped memory for discriminator_forward.1']
    %11 = vsyncpa [#allocation4], 0
    // Predicated region
    $region2: #{discriminator_forward.1} parent=1 // pred_check
      _
    $region3: #{discriminator_forward.1} parent=1 // pred_check_branch
      %13 = sbr.rel (0) target = $region5
    $region4: #{discriminator_forward.1} parent=1 // pred_region
      _
    $region5: #{discriminator_forward.1} parent=1 // pred_fallthru
      _
    // Predicated region
    $region6: #{discriminator_forward.1} parent=1 // pred_check
      _
    $region7: #{discriminator_forward.1} parent=1 // pred_check_branch
      %15 = sbr.rel (0) target = $region9
    $region8: #{discriminator_forward.1} parent=1 // pred_region
      _
    $region9: #{discriminator_forward.1} parent=1 // pred_fallthru
      _
    // Predicated region
    $region10: #{discriminator_forward.1} parent=1 // pred_check
      _
    $region11: #{discriminator_forward.1} parent=1 // pred_check_branch
      %17 = sbr.rel (0) target = $region13
    $region12: #{discriminator_forward.1} parent=1 // pred_region
      _
    $region13: #{discriminator_forward.1} parent=1 // pred_fallthru
      _
    // Predicated region
    $region14: #{discriminator_forward.1} parent=1 // pred_check
      _
    $region15: #{discriminator_forward.1} parent=1 // pred_check_branch
      %19 = sbr.rel (0) target = $region17
    $region16: #{discriminator_forward.1} parent=1 // pred_region
      _
    $region17: #{discriminator_forward.1} parent=1 // pred_fallthru
      _
    // Predicated region
    $region18: #{discriminator_forward.1} parent=1 // pred_check
      _
    $region19: #{discriminator_forward.1} parent=1 // pred_check_branch
      %21 = sbr.rel (0) target = $region21
    $region20: #{discriminator_forward.1} parent=1 // pred_region
      _
    $region21: #{discriminator_forward.1} parent=1 // pred_fallthru
      _
    %v23 = vld [vmem:[%s1] sm:$0xf]
    %v24 = vld [vmem:[%s1 + $0x4] sm:$0xf]
    %v25 = vld [vmem:[%s1 + $0x8] sm:$0xf]
    %v26 = vld [vmem:[%s1 + $0xc] sm:$0xf]
    %v27 = vld [vmem:[%s1 + $0x10] sm:$0xf]
    %v28 = vld [vmem:[%s1 + $0x14] sm:$0xf]
    %v29 = vld [vmem:[%s1 + $0x18] sm:$0xf]
    %v30 = vld [vmem:[%s1 + $0x1c] sm:$0xf]
    %v31 = vld [vmem:[%s1 + $0x20] sm:$0xf]
    %v32 = vld [vmem:[%s1 + $0x24] sm:$0xf]
    %v33 = vld [vmem:[%s1 + $0x28] sm:$0xf]
    %v34 = vld [vmem:[%s1 + $0x2c] sm:$0xf]
    %v35 = vld [vmem:[%s1 + $0x30] sm:$0xf]
    %v36 = vld [vmem:[%s1 + $0x34] sm:$0xf]
    %v37 = vld [vmem:[%s1 + $0x38] sm:$0xf]
    %v38 = vld [vmem:[%s1 + $0x3c] sm:$0xf]
    %v39 = vld [vmem:[%s1 + $0x40] sm:$0xf]
    %v40 = vld [vmem:[%s1 + $0x44] sm:$0xf]
    %v41 = vld [vmem:[%s1 + $0x48] sm:$0xf]
    %v42 = vld [vmem:[%s1 + $0x4c] sm:$0xf]
    %v43 = vld [vmem:[%s1 + $0x50] sm:$0xf]
    %v44 = vld [vmem:[%s0] sm:$0xf]
    %v45 = vld [vmem:[%s2] sm:$0xff]
    %v46 = vld [vmem:[%s2 + $0x8] sm:$0xff]
    %v47 = vld [vmem:[%s2 + $0x10] sm:$0xff]
    %v48 = vld [vmem:[%s2 + $0x18] sm:$0xff]
    %v49 = vld [vmem:[%s2 + $0x20] sm:$0xff]
    %v50 = vld [vmem:[%s2 + $0x28] sm:$0xff]
    %v51 = vld [vmem:[%s2 + $0x30] sm:$0xff]
    %v52 = vld [vmem:[%s2 + $0x38] sm:$0xff]
    %v53 = vld [vmem:[%s2 + $0x40] sm:$0xff]
    %v54 = vld [vmem:[%s2 + $0x48] sm:$0xff]
    %v55 = vld [vmem:[%s2 + $0x50] sm:$0xff]
    %v56 = vld [vmem:[%s2 + $0x58] sm:$0xff]
    %v57 = vld [vmem:[%s2 + $0x60] sm:$0xff]
    %v58 = vld [vmem:[%s2 + $0x68] sm:$0xff]
    %v59 = vld [vmem:[%s2 + $0x70] sm:$0xff]
    %v60 = vld [vmem:[%s2 + $0x78] sm:$0xff]
    %v61 = vld [vmem:[%s2 + $0x80] sm:$0xff]
    %v62 = vld [vmem:[%s2 + $0x88] sm:$0xff]
    %v63 = vld [vmem:[%s2 + $0x90] sm:$0xff]
    %v64 = vld [vmem:[%s2 + $0x98] sm:$0xff]
    %v65 = vld [vmem:[%s2 + $0xa0] sm:$0xff]
    %67 = vset.pattern.permute.xlu0 0
    %68 = vperm.xlu0 %67, %v45
    %v69 = vpop.permute.xlu0 %68
    %72 = vset.pattern.permute.xlu0 0
    %73 = vperm.xlu0 %72, %v46
    %v74 = vpop.permute.xlu0 %73
    %77 = vset.pattern.permute.xlu0 0
    %78 = vperm.xlu0 %77, %v47
    %v79 = vpop.permute.xlu0 %78
    %82 = vset.pattern.permute.xlu0 0
    %83 = vperm.xlu0 %82, %v48
    %v84 = vpop.permute.xlu0 %83
    %87 = vset.pattern.permute.xlu0 0
    %88 = vperm.xlu0 %87, %v49
    %v89 = vpop.permute.xlu0 %88
    %92 = vset.pattern.permute.xlu0 0
    %93 = vperm.xlu0 %92, %v50
    %v94 = vpop.permute.xlu0 %93
    %97 = vset.pattern.permute.xlu0 0
    %98 = vperm.xlu0 %97, %v51
    %v99 = vpop.permute.xlu0 %98
    %102 = vset.pattern.permute.xlu0 0
    %103 = vperm.xlu0 %102, %v52
    %v104 = vpop.permute.xlu0 %103
    %107 = vset.pattern.permute.xlu0 0
    %108 = vperm.xlu0 %107, %v53
    %v109 = vpop.permute.xlu0 %108
    %112 = vset.pattern.permute.xlu0 0
    %113 = vperm.xlu0 %112, %v54
    %v114 = vpop.permute.xlu0 %113
    %117 = vset.pattern.permute.xlu0 0
    %118 = vperm.xlu0 %117, %v55
    %v119 = vpop.permute.xlu0 %118
    %122 = vset.pattern.permute.xlu0 0
    %123 = vperm.xlu0 %122, %v56
    %v124 = vpop.permute.xlu0 %123
    %127 = vset.pattern.permute.xlu0 0
    %128 = vperm.xlu0 %127, %v57
    %v129 = vpop.permute.xlu0 %128
    %132 = vset.pattern.permute.xlu0 0
    %133 = vperm.xlu0 %132, %v58
    %v134 = vpop.permute.xlu0 %133
    %137 = vset.pattern.permute.xlu0 0
    %138 = vperm.xlu0 %137, %v59
    %v139 = vpop.permute.xlu0 %138
    %142 = vset.pattern.permute.xlu0 0
    %143 = vperm.xlu0 %142, %v60
    %v144 = vpop.permute.xlu0 %143
    %147 = vset.pattern.permute.xlu0 0
    %148 = vperm.xlu0 %147, %v61
    %v149 = vpop.permute.xlu0 %148
    %152 = vset.pattern.permute.xlu0 0
    %153 = vperm.xlu0 %152, %v62
    %v154 = vpop.permute.xlu0 %153
    %157 = vset.pattern.permute.xlu0 0
    %158 = vperm.xlu0 %157, %v63
    %v159 = vpop.permute.xlu0 %158
    %162 = vset.pattern.permute.xlu0 0
    %163 = vperm.xlu0 %162, %v64
    %v164 = vpop.permute.xlu0 %163
    %167 = vset.pattern.permute.xlu0 0
    %168 = vperm.xlu0 %167, %v65
    %v169 = vpop.permute.xlu0 %168
    %v192 = vunpack.c.l.b16 %v23
    %v193 = vunpack.c.l.b16 %v24
    %v194 = vunpack.c.l.b16 %v25
    %v195 = vunpack.c.l.b16 %v26
    %v196 = vunpack.c.l.b16 %v27
    %v197 = vunpack.c.l.b16 %v28
    %v198 = vunpack.c.l.b16 %v29
    %v199 = vunpack.c.l.b16 %v30
    %v200 = vunpack.c.l.b16 %v31
    %v201 = vunpack.c.l.b16 %v32
    %v202 = vunpack.c.l.b16 %v33
    %v203 = vunpack.c.l.b16 %v34
    %v204 = vunpack.c.l.b16 %v35
    %v205 = vunpack.c.l.b16 %v36
    %v206 = vunpack.c.l.b16 %v37
    %v207 = vunpack.c.l.b16 %v38
    %v208 = vunpack.c.l.b16 %v39
    %v209 = vunpack.c.l.b16 %v40
    %v210 = vunpack.c.l.b16 %v41
    %v211 = vunpack.c.l.b16 %v42
    %v212 = vunpack.c.l.b16 %v43
    %v213 = vpack.c.b16 %v193, %v192
    %v214 = vpack.c.b16 %v195, %v194
    %v215 = vpack.c.b16 %v197, %v196
    %v216 = vpack.c.b16 %v199, %v198
    %v217 = vpack.c.b16 %v201, %v200
    %v218 = vpack.c.b16 %v203, %v202
    %v219 = vpack.c.b16 %v205, %v204
    %v220 = vpack.c.b16 %v207, %v206
    %v221 = vpack.c.b16 %v209, %v208
    %v222 = vpack.c.b16 %v211, %v210
    %v223 = vpack.c.b16 %v212, %v212
    %vm224 = vcmask 130048
    %v226 = vsel %vm224, %v213, 0
    %v229 = vsel %vm224, %v214, 0
    %v232 = vsel %vm224, %v215, 0
    %v235 = vsel %vm224, %v216, 0
    %v238 = vsel %vm224, %v217, 0
    %v241 = vsel %vm224, %v218, 0
    %v244 = vsel %vm224, %v219, 0
    %v247 = vsel %vm224, %v220, 0
    %v250 = vsel %vm224, %v221, 0
    %v253 = vsel %vm224, %v222, 0
    %v256 = vsel %vm224, %v223, 0
    %v259 = vsel %vm224, %v44, 0
    %261 = vmatprep.subr.bf16.mxu0 0
    %262 = vmatpush1.bf16.xpose.msra.mxu0 0
    %263 = vmatprep.subr.bf16.mxu0 0
    %264 = vmatpush1.bf16.xpose.msra.mxu0 0
    %265 = vmatprep.subr.bf16.mxu0 0
    %266 = vmatpush1.bf16.xpose.msra.mxu0 0
    %267 = vmatprep.subr.bf16.mxu0 0
    %268 = vmatpush1.bf16.xpose.msra.mxu0 0
    %269 = vmatprep.subr.bf16.mxu0 0
    %270 = vmatpush1.bf16.xpose.msra.mxu0 0
    %271 = vmatprep.subr.bf16.mxu0 0
    %272 = vmatpush1.bf16.xpose.msra.mxu0 0
    %273 = vmatprep.subr.bf16.mxu0 0
    %274 = vmatpush1.bf16.xpose.msra.mxu0 0
    %275 = vmatprep.subr.bf16.mxu0 0
    %276 = vmatpush1.bf16.xpose.msra.mxu0 %v259
    %277 = vmatprep.subr.bf16.mxu0 0
    %278 = vmatpush2.bf16.xpose.msra.mxu0 0
    %279 = vmatprep.subr.bf16.mxu0 0
    %280 = vmatpush2.bf16.xpose.msra.mxu0 0
    %281 = vmatprep.subr.bf16.mxu0 0
    %282 = vmatpush2.bf16.xpose.msra.mxu0 0
    %283 = vmatprep.subr.bf16.mxu0 0
    %284 = vmatpush2.bf16.xpose.msra.mxu0 0
    %285 = vmatprep.subr.bf16.mxu0 0
    %286 = vmatpush2.bf16.xpose.msra.mxu0 0
    %287 = vmatprep.subr.bf16.mxu0 0
    %288 = vmatpush2.bf16.xpose.msra.mxu0 0
    %289 = vmatprep.subr.bf16.mxu0 0
    %290 = vmatpush2.bf16.xpose.msra.mxu0 0
    %291 = vmatprep.subr.bf16.mxu0 0
    %292 = vmatpush2.bf16.xpose.msra.mxu0 0
    %293 = vmatprep.mubr.bf16.mxu0 0
    %294 = vmatmul.mubr.bf16.gmra.mxu0 %v226
    %v295 = vpop.f32.mrf.mxu0
    %v296 = vadd.f32 %v69, %v295
    %v297 = vpop.f32.mrf.mxu0
    %v298 = vpop.f32.mrf.mxu0
    %v299 = vadd.f32 %v74, %v298
    %v300 = vpop.f32.mrf.mxu0
    %301 = vmatprep.mubr.bf16.mxu0 0
    %302 = vmatmul.mubr.bf16.gmra.mxu0 %v229
    %v303 = vpop.f32.mrf.mxu0
    %v304 = vadd.f32 %v79, %v303
    %v305 = vpop.f32.mrf.mxu0
    %v306 = vpop.f32.mrf.mxu0
    %v307 = vadd.f32 %v84, %v306
    %v308 = vpop.f32.mrf.mxu0
    %309 = vmatprep.mubr.bf16.mxu0 0
    %310 = vmatmul.mubr.bf16.gmra.mxu0 %v232
    %v311 = vpop.f32.mrf.mxu0
    %v312 = vadd.f32 %v89, %v311
    %v313 = vpop.f32.mrf.mxu0
    %v314 = vpop.f32.mrf.mxu0
    %v315 = vadd.f32 %v94, %v314
    %v316 = vpop.f32.mrf.mxu0
    %317 = vmatprep.mubr.bf16.mxu0 0
    %318 = vmatmul.mubr.bf16.gmra.mxu0 %v235
    %v319 = vpop.f32.mrf.mxu0
    %v320 = vadd.f32 %v99, %v319
    %v321 = vpop.f32.mrf.mxu0
    %v322 = vpop.f32.mrf.mxu0
    %v323 = vadd.f32 %v104, %v322
    %v324 = vpop.f32.mrf.mxu0
    %325 = vmatprep.mubr.bf16.mxu0 0
    %326 = vmatmul.mubr.bf16.gmra.mxu0 %v238
    %v327 = vpop.f32.mrf.mxu0
    %v328 = vadd.f32 %v109, %v327
    %v329 = vpop.f32.mrf.mxu0
    %v330 = vpop.f32.mrf.mxu0
    %v331 = vadd.f32 %v114, %v330
    %v332 = vpop.f32.mrf.mxu0
    %333 = vmatprep.mubr.bf16.mxu0 0
    %334 = vmatmul.mubr.bf16.gmra.mxu0 %v241
    %v335 = vpop.f32.mrf.mxu0
    %v336 = vadd.f32 %v119, %v335
    %v337 = vpop.f32.mrf.mxu0
    %v338 = vpop.f32.mrf.mxu0
    %v339 = vadd.f32 %v124, %v338
    %v340 = vpop.f32.mrf.mxu0
    %341 = vmatprep.mubr.bf16.mxu0 0
    %342 = vmatmul.mubr.bf16.gmra.mxu0 %v244
    %v343 = vpop.f32.mrf.mxu0
    %v344 = vadd.f32 %v129, %v343
    %v345 = vpop.f32.mrf.mxu0
    %v346 = vpop.f32.mrf.mxu0
    %v347 = vadd.f32 %v134, %v346
    %v348 = vpop.f32.mrf.mxu0
    %349 = vmatprep.mubr.bf16.mxu0 0
    %350 = vmatmul.mubr.bf16.gmra.mxu0 %v247
    %v351 = vpop.f32.mrf.mxu0
    %v352 = vadd.f32 %v139, %v351
    %v353 = vpop.f32.mrf.mxu0
    %v354 = vpop.f32.mrf.mxu0
    %v355 = vadd.f32 %v144, %v354
    %v356 = vpop.f32.mrf.mxu0
    %357 = vmatprep.mubr.bf16.mxu0 0
    %358 = vmatmul.mubr.bf16.gmra.mxu0 %v250
    %v359 = vpop.f32.mrf.mxu0
    %v360 = vadd.f32 %v149, %v359
    %v361 = vpop.f32.mrf.mxu0
    %v362 = vpop.f32.mrf.mxu0
    %v363 = vadd.f32 %v154, %v362
    %v364 = vpop.f32.mrf.mxu0
    %365 = vmatprep.mubr.bf16.mxu0 0
    %366 = vmatmul.mubr.bf16.gmra.mxu0 %v253
    %v367 = vpop.f32.mrf.mxu0
    %v368 = vadd.f32 %v159, %v367
    %v369 = vpop.f32.mrf.mxu0
    %v370 = vpop.f32.mrf.mxu0
    %v371 = vadd.f32 %v164, %v370
    %v372 = vpop.f32.mrf.mxu0
    %373 = vmatprep.mubr.bf16.mxu0 0
    %374 = vmatmul.mubr.bf16.gmra.mxu0 %v256
    %v375 = vpop.f32.mrf.mxu0
    %v376 = vadd.f32 %v169, %v375
    %v377 = vpop.f32.mrf.mxu0
    %v378 = vpop.f32.mrf.mxu0
    %v379 = vpop.f32.mrf.mxu0
    %380 = vdwg.mxu0
    %v381 = vxor.u32 %v296, 2147483648
    %v382 = vxor.u32 %v299, 2147483648
    %v383 = vxor.u32 %v304, 2147483648
    %v384 = vxor.u32 %v307, 2147483648
    %v385 = vxor.u32 %v312, 2147483648
    %v386 = vxor.u32 %v315, 2147483648
    %v387 = vxor.u32 %v320, 2147483648
    %v388 = vmul.f32 %v381, 1.442695
    %v389 = vpow.pop %v388
    %v390 = vmul.f32 %v382, 1.442695
    %v391 = vpow.pop %v390
    %v392 = vmul.f32 %v383, 1.442695
    %v393 = vpow.pop %v392
    %v394 = vmul.f32 %v384, 1.442695
    %v395 = vpow.pop %v394
    %v396 = vmul.f32 %v385, 1.442695
    %v397 = vpow.pop %v396
    %v398 = vmul.f32 %v386, 1.442695
    %v399 = vpow.pop %v398
    %v400 = vmul.f32 %v387, 1.442695
    %v401 = vpow.pop %v400
    %v402 = vadd.f32 %v389, 1.0
    %v403 = vadd.f32 %v391, 1.0
    %v404 = vadd.f32 %v393, 1.0
    %v405 = vadd.f32 %v395, 1.0
    %v406 = vadd.f32 %v397, 1.0
    %v407 = vadd.f32 %v399, 1.0
    %v408 = vadd.f32 %v401, 1.0
    %v409 = vrcp.pop %v402
    %v410 = vmul.f32 1.0, %v409
    %v411 = vrcp.pop %v403
    %v412 = vmul.f32 1.0, %v411
    %v413 = vrcp.pop %v404
    %v414 = vmul.f32 1.0, %v413
    %v415 = vrcp.pop %v405
    %v416 = vmul.f32 1.0, %v415
    %v417 = vrcp.pop %v406
    %v418 = vmul.f32 1.0, %v417
    %v419 = vrcp.pop %v407
    %v420 = vmul.f32 1.0, %v419
    %v421 = vrcp.pop %v408
    %v422 = vmul.f32 1.0, %v421
    %v423 = vtanh.pop %v323
    %v424 = vtanh.pop %v328
    %v425 = vtanh.pop %v331
    %v426 = vtanh.pop %v336
    %v427 = vtanh.pop %v339
    %v428 = vtanh.pop %v344
    %v429 = vtanh.pop %v347
    %v430 = vmul.f32 %v410, %v423
    %v431 = vmul.f32 %v412, %v424
    %v432 = vmul.f32 %v414, %v425
    %v433 = vmul.f32 %v416, %v426
    %v434 = vmul.f32 %v418, %v427
    %v435 = vmul.f32 %v420, %v428
    %v436 = vmul.f32 %v422, %v429
    %v437 = vxor.u32 %v352, 2147483648
    %v438 = vxor.u32 %v355, 2147483648
    %v439 = vxor.u32 %v360, 2147483648
    %v440 = vxor.u32 %v363, 2147483648
    %v441 = vxor.u32 %v368, 2147483648
    %v442 = vxor.u32 %v371, 2147483648
    %v443 = vxor.u32 %v376, 2147483648
    %v444 = vmul.f32 %v437, 1.442695
    %v445 = vpow.pop %v444
    %v446 = vmul.f32 %v438, 1.442695
    %v447 = vpow.pop %v446
    %v448 = vmul.f32 %v439, 1.442695
    %v449 = vpow.pop %v448
    %v450 = vmul.f32 %v440, 1.442695
    %v451 = vpow.pop %v450
    %v452 = vmul.f32 %v441, 1.442695
    %v453 = vpow.pop %v452
    %v454 = vmul.f32 %v442, 1.442695
    %v455 = vpow.pop %v454
    %v456 = vmul.f32 %v443, 1.442695
    %v457 = vpow.pop %v456
    %v458 = vadd.f32 %v445, 1.0
    %v459 = vadd.f32 %v447, 1.0
    %v460 = vadd.f32 %v449, 1.0
    %v461 = vadd.f32 %v451, 1.0
    %v462 = vadd.f32 %v453, 1.0
    %v463 = vadd.f32 %v455, 1.0
    %v464 = vadd.f32 %v457, 1.0
    %v465 = vrcp.pop %v458
    %v466 = vmul.f32 1.0, %v465
    %v467 = vrcp.pop %v459
    %v468 = vmul.f32 1.0, %v467
    %v469 = vrcp.pop %v460
    %v470 = vmul.f32 1.0, %v469
    %v471 = vrcp.pop %v461
    %v472 = vmul.f32 1.0, %v471
    %v473 = vrcp.pop %v462
    %v474 = vmul.f32 1.0, %v473
    %v475 = vrcp.pop %v463
    %v476 = vmul.f32 1.0, %v475
    %v477 = vrcp.pop %v464
    %v478 = vmul.f32 1.0, %v477
    %v479 = vtanh.pop %v430
    %v480 = vtanh.pop %v431
    %v481 = vtanh.pop %v432
    %v482 = vtanh.pop %v433
    %v483 = vtanh.pop %v434
    %v484 = vtanh.pop %v435
    %v485 = vtanh.pop %v436
    %v486 = vmul.f32 %v466, %v479
    %v487 = vmul.f32 %v468, %v480
    %v488 = vmul.f32 %v470, %v481
    %v489 = vmul.f32 %v472, %v482
    %v490 = vmul.f32 %v474, %v483
    %v491 = vmul.f32 %v476, %v484
    %v492 = vmul.f32 %v478, %v485
    %v493 = vld [vmem:[%s3] sm:$0xff]
    %v494 = vld [vmem:[%s3 + $0x8] sm:$0xff]
    %v495 = vld [vmem:[%s3 + $0x10] sm:$0xff]
    %v496 = vld [vmem:[%s3 + $0x18] sm:$0xff]
    %v497 = vld [vmem:[%s3 + $0x20] sm:$0xff]
    %v498 = vld [vmem:[%s3 + $0x28] sm:$0xff]
    %v499 = vld [vmem:[%s3 + $0x30] sm:$0xff]
    %501 = vset.pattern.permute.xlu0 0
    %502 = vperm.xlu0 %501, %v493
    %v503 = vpop.permute.xlu0 %502
    %506 = vset.pattern.permute.xlu0 0
    %507 = vperm.xlu0 %506, %v494
    %v508 = vpop.permute.xlu0 %507
    %511 = vset.pattern.permute.xlu0 0
    %512 = vperm.xlu0 %511, %v495
    %v513 = vpop.permute.xlu0 %512
    %516 = vset.pattern.permute.xlu0 0
    %517 = vperm.xlu0 %516, %v496
    %v518 = vpop.permute.xlu0 %517
    %521 = vset.pattern.permute.xlu0 0
    %522 = vperm.xlu0 %521, %v497
    %v523 = vpop.permute.xlu0 %522
    %526 = vset.pattern.permute.xlu0 0
    %527 = vperm.xlu0 %526, %v498
    %v528 = vpop.permute.xlu0 %527
    %531 = vset.pattern.permute.xlu0 0
    %532 = vperm.xlu0 %531, %v499
    %v533 = vpop.permute.xlu0 %532
    %v535 = vmul.f32 %v486, %v503
    %v536 = vmul.f32 %v487, %v508
    %v537 = vmul.f32 %v488, %v513
    %v538 = vmul.f32 %v489, %v518
    %v539 = vmul.f32 %v490, %v523
    %v540 = vmul.f32 %v491, %v528
    %v541 = vmul.f32 %v492, %v533
    %vm542 = vcmask 64512
    %v543 = vsel %vm542, %v535, 0.0
    %v544 = vsel %vm542, %v536, 0.0
    %v545 = vadd.f32 %v543, %v544
    %v546 = vsel %vm542, %v537, 0.0
    %v547 = vadd.f32 %v545, %v546
    %v548 = vsel %vm542, %v538, 0.0
    %v549 = vadd.f32 %v547, %v548
    %v550 = vsel %vm542, %v539, 0.0
    %v551 = vadd.f32 %v549, %v550
    %v552 = vsel %vm542, %v540, 0.0
    %v553 = vadd.f32 %v551, %v552
    %v554 = vsel %vm542, %v541, 0.0
    %v555 = vadd.f32 %v553, %v554
    %v556 = vrot.slane %v555, 4
    %v557 = vadd.f32 %v555, %v556
    %v558 = vrot.slane %v557, 2
    %v559 = vadd.f32 %v557, %v558
    %v560 = vrot.slane %v559, 1
    %v561 = vadd.f32 %v559, %v560
    %s562 = sld [smem:[#allocation2]]
    %v563 = vstv %s562
    %v564 = vadd.f32 %v561, %v563
    %v565 = vxor.u32 %v564, 2147483648
    %v566 = vmul.f32 %v565, 1.442695
    %v567 = vpow.pop %v566
    %v568 = vadd.f32 %v567, 1.0
    %v569 = vrcp.pop %v568
    %v570 = vmul.f32 1.0, %v569
    %vm571 = vcmask 57344
    %572 = vst.msk [vmem:[#allocation3] sm:$0x1] %vm571, %v570
    // Predicated region
    $region22: #{discriminator_forward.1} parent=1 // pred_check
      _
    $region23: #{discriminator_forward.1} parent=1 // pred_check_branch
      %574 = sbr.rel (0) target = $region25
    $region24: #{discriminator_forward.1} parent=1 // pred_region
      %s576 = ssub.s32 16, 16
      %577 = vsyncadd [#allocation4], %s576
      %s579 = sshll.u32 [#allocation3], 4
      %s580 = int_to_ptr.vmem [resolvable:$true] %s579
      %582 = dma.vmem_to_hbm [thread:$0]  %s580, 16, %s5, [#allocation4]
    $region25: #{discriminator_forward.1} parent=1 // pred_fallthru
      _
    // Predicated region
    $region26: #{discriminator_forward.1} parent=1 // pred_check
      _
    $region27: #{discriminator_forward.1} parent=1 // pred_check_branch
      %584 = sbr.rel (0) target = $region29
    $region28: #{discriminator_forward.1} parent=1 // pred_region
      %585 = dma.done [#allocation4], 16
    $region29: #{discriminator_forward.1} parent=1 // pred_fallthru
      _
    %586 = vsyncpa [#allocation4], 1

</llo_original>
